<compile_context>
chip_gen: v7x
topology: tpu7x:2x2x1
jax: 0.10.0
libtpu: 0.0.40
codegen_flags: <defaults>
</compile_context>

<pallas_src>
import functools

import jax
import jax.numpy as jnp
from jax.experimental import pallas as pl
from jax.experimental.pallas import tpu as pltpu

ALPHA = 4.0                      # module constant self.alpha
_LANE = 128                      # TPU lane width
_SUBLANE = 8                     # TPU sublane width
_TL_MAX = 512                    # lane-tile target (multiple of 128), v7x-safe
_VMEM_LIMIT = 48 * 1024 * 1024   # scoped-VMEM budget (< v7x 64 MiB physical)


def _round_up(n, m):
    return (n + m - 1) // m * m


def _pad_and_tile(L, tl_max=_TL_MAX):
    """Pad the flattened spatial axis to a lane-dense multiple of the tile."""
    Lp = _round_up(L, _LANE)
    if Lp <= tl_max:
        return Lp, Lp
    return _round_up(Lp, tl_max), tl_max


# ----------------------------------------------------------------------------
# Pallas kernels
# ----------------------------------------------------------------------------
def _offset_matmul_kernel(w_ref, b_ref, x_ref, o_ref):
    # w: (Mp, Kd_p)   b: (Mp, 1)   x: (Kd_p, TL)   o: (Mp, TL)
    acc = jnp.dot(w_ref[...].astype(jnp.bfloat16),
                  x_ref[...].astype(jnp.bfloat16),
                  preferred_element_type=jnp.float32)
    o_ref[...] = (acc + b_ref[...]).astype(o_ref.dtype)


def offset_projection(w_pad, b_pad, xcol_flat, tl):
    """(Mp, Kd_p) @ (Kd_p, N) + b, tiled over the lane-dense N = B * Lp axis."""
    Mp, Kd_p = w_pad.shape
    N = xcol_flat.shape[1]
    return pl.pallas_call(
        _offset_matmul_kernel,
        out_shape=jax.ShapeDtypeStruct((Mp, N), xcol_flat.dtype),
        grid=(N // tl,),
        in_specs=[
            pl.BlockSpec((Mp, Kd_p), lambda j: (0, 0)),   # weight VMEM-resident
            pl.BlockSpec((Mp, 1), lambda j: (0, 0)),
            pl.BlockSpec((Kd_p, tl), lambda j: (0, j)),
        ],
        out_specs=pl.BlockSpec((Mp, tl), lambda j: (0, j)),
        compiler_params=pltpu.CompilerParams(
            dimension_semantics=("parallel",),
            vmem_limit_bytes=_VMEM_LIMIT),
    )(w_pad, b_pad, xcol_flat)


def _combine_matmul_kernel(w_ref, x_ref, o_ref):
    # w: (Cout_p, M_p)   x: (1, M_p, TL)   o: (1, Cout_p, TL)
    acc = jnp.dot(w_ref[...].astype(jnp.bfloat16),
                  x_ref[0].astype(jnp.bfloat16),
                  preferred_element_type=jnp.float32)
    o_ref[0] = acc.astype(o_ref.dtype)


def combine_matmul(w_mat, xcol, tl):
    """out[b] = W @ xcol[b], tiled over batch and the lane-dense spatial axis."""
    B, M_p, Lp = xcol.shape
    Cout_p = w_mat.shape[0]
    return pl.pallas_call(
        _combine_matmul_kernel,
        out_shape=jax.ShapeDtypeStruct((B, Cout_p, Lp), xcol.dtype),
        grid=(B, Lp // tl),
        in_specs=[
            pl.BlockSpec((Cout_p, M_p), lambda i, j: (0, 0)),   # resident weight
            pl.BlockSpec((1, M_p, tl), lambda i, j: (i, 0, j)),
        ],
        out_specs=pl.BlockSpec((1, Cout_p, tl), lambda i, j: (i, 0, j)),
        compiler_params=pltpu.CompilerParams(
            dimension_semantics=("parallel", "parallel"),
            vmem_limit_bytes=_VMEM_LIMIT),
    )(w_mat, xcol)


# ----------------------------------------------------------------------------
# Plain-JAX glue (reshapes, grids, gathers)
# ----------------------------------------------------------------------------
def unfold_standard(x, K, dilation, padding, stride):
    """F.unfold equivalent: (B, C, H, W) -> (B, C*K*K, out_H*out_W)."""
    B, C, H, W = x.shape
    out_H = (H + 2 * padding - dilation * (K - 1) - 1) // stride + 1
    out_W = (W + 2 * padding - dilation * (K - 1) - 1) // stride + 1
    xp = jnp.pad(x, ((0, 0), (0, 0), (padding, padding), (padding, padding)))
    patches = []
    for ki in range(K):
        for kj in range(K):
            sl = xp[:, :,
                    ki * dilation: ki * dilation + (out_H - 1) * stride + 1: stride,
                    kj * dilation: kj * dilation + (out_W - 1) * stride + 1: stride]
            patches.append(sl)
    col = jnp.stack(patches, axis=2)           # (B, C, K*K, out_H, out_W)
    return col.reshape(B, C * K * K, out_H * out_W)


def init_base(B, out_h, out_w, x_h, x_w, K, stride, dilation, dtype):
    # Mirrors the torch reference ('ij' meshgrid); assumes the arange lengths
    # equal out_h/out_w (valid for the default stride/pad/dilation config).
    h_st = (K - 1) // 2 * dilation
    h_ed = x_h - K // 2 * dilation
    w_st = (K - 1) // 2 * dilation
    w_ed = x_w - K // 2 * dilation
    rows = jnp.arange(h_st, h_ed, stride)
    cols = jnp.arange(w_st, w_ed, stride)
    base_x = jnp.broadcast_to(rows[:, None], (out_h, out_w))
    base_y = jnp.broadcast_to(cols[None, :], (out_h, out_w))
    base_x = jnp.broadcast_to(base_x[None, None], (B, K * K, out_h, out_w))
    base_y = jnp.broadcast_to(base_y[None, None], (B, K * K, out_h, out_w))
    return jnp.concatenate([base_x, base_y], axis=1).astype(dtype)


def init_delta(B, out_H, out_W, K, dilation, dtype):
    h_st = -((K - 1) // 2) * dilation
    h_ed = K // 2 * dilation + 1
    vals = jnp.arange(h_st, h_ed, dilation)
    dx = jnp.repeat(vals, K)          # meshgrid 'ij' row values, flattened
    dy = jnp.tile(vals, K)
    delta = jnp.concatenate([dx, dy]).reshape(1, 2 * K * K, 1, 1)
    return jnp.broadcast_to(delta, (B, 2 * K * K, out_H, out_W)).astype(dtype)


def bilinear_unfold(x, base, delta, K, stride, padding, dilation):
    """The module's custom `unfold` (bilinear sampling at base+delta)."""
    # TODO(synk): data-dependent gather done with jnp.take_along_axis in JAX;
    #             a Pallas version would need manual DMA gather.
    B, C, H, W = x.shape
    out_H = (H + 2 * padding - dilation * (K - 1) - 1) // stride + 1
    out_W = (W + 2 * padding - dilation * (K - 1) - 1) // stride + 1
    Hp = H + 2 * dilation
    Wp = W + 2 * dilation
    xp = jnp.pad(x, ((0, 0), (0, 0), (dilation, dilation), (dilation, dilation)))

    coord = (base + delta).reshape(B, 2 * K * K, -1)
    c_x = coord[:, :K * K, :].reshape(B, -1)
    c_y = coord[:, K * K:, :].reshape(B, -1)
    c_x = jnp.clip(c_x, 0, Hp - 1)
    c_y = jnp.clip(c_y, 0, Wp - 1)

    tl_x = jnp.floor(c_x).astype(jnp.int32)
    tl_y = jnp.floor(c_y).astype(jnp.int32)
    br_x = tl_x + 1
    br_y = tl_y + 1
    tl_x = jnp.clip(tl_x, 0, Hp - 2)
    tl_y = jnp.clip(tl_y, 0, Wp - 2)
    br_x = jnp.clip(br_x, 1, Hp - 1)
    br_y = jnp.clip(br_y, 1, Wp - 1)

    idx_tl = tl_x * Wp + tl_y
    idx_tr = tl_x * Wp + br_y
    idx_bl = br_x * Wp + tl_y
    idx_br = br_x * Wp + br_y

    x_flat = xp.reshape(B, C, Hp * Wp)
    KL = idx_tl.shape[1]

    def gather(idx):
        idx3 = jnp.broadcast_to(idx[:, None, :], (B, C, KL))
        return jnp.take_along_axis(x_flat, idx3, axis=-1)

    x_tl = gather(idx_tl)
    x_tr = gather(idx_tr)
    x_bl = gather(idx_bl)
    x_br = gather(idx_br)

    fx_tl = tl_x.astype(c_x.dtype)
    fy_tl = tl_y.astype(c_y.dtype)
    fx_br = br_x.astype(c_x.dtype)
    fy_br = br_y.astype(c_y.dtype)

    c_tl = (1 - (c_x - fx_tl)) * (1 - (c_y - fy_tl))
    c_tr = (1 - (c_x - fx_tl)) * (1 + (c_y - fy_br))
    c_bl = (1 + (c_x - fx_br)) * (1 - (c_y - fy_tl))
    c_br = (1 + (c_x - fx_br)) * (1 + (c_y - fy_br))

    out = (x_tl * c_tl[:, None, :] + x_tr * c_tr[:, None, :]
           + x_bl * c_bl[:, None, :] + x_br * c_br[:, None, :])
    return out.reshape(B, C * K * K, out_H * out_W)


# ----------------------------------------------------------------------------
# DCNv3_failed forward
# ----------------------------------------------------------------------------
@functools.partial(jax.jit, static_argnames=("K", "stride", "pad", "dilation"))
def dcnv3_failed_forward(x_nhwc, depth, weight_offset, bias_offset, weight,
                         K=3, stride=1, pad=1, dilation=1):
    x = jnp.transpose(x_nhwc, (0, 3, 1, 2))            # (B, C, H, W)
    B, C, H, W = x.shape
    out_H = (H + 2 * pad - dilation * (K - 1) - 1) // stride + 1
    out_W = (W + 2 * pad - dilation * (K - 1) - 1) // stride + 1
    L = out_H * out_W
    KK = K * K
    dtype = x.dtype
    Lp, TL = _pad_and_tile(L)
    pad_L = Lp - L

    base = init_base(B, out_H, out_W, H + 2 * dilation, W + 2 * dilation,
                     K, stride, dilation, dtype)
    delta = init_delta(B, out_H, out_W, K, dilation, dtype)

    # ---- offset branch: standard unfold of [x, depth], Pallas matmul (k1) ---
    x_depth = jnp.concatenate([x, depth.astype(dtype)], axis=1)      # (B, C+1, H, W)
    x_depth_col = unfold_standard(x_depth, K, dilation, pad, stride)  # (B, Kd, L)
    Kd = (C + 1) * KK
    Kd_p = _round_up(Kd, _SUBLANE)
    xcol_p = jnp.pad(x_depth_col, ((0, 0), (0, Kd_p - Kd), (0, pad_L)))
    # fold batch into the lane axis so the small matmul stays lane-dense
    xcol_flat = jnp.transpose(xcol_p, (1, 0, 2)).reshape(Kd_p, B * Lp)

    M_off = 2 * KK
    M_off_p = _round_up(M_off, _SUBLANE)                 # pad 18 -> 24 sublanes
    w_off = weight_offset.reshape(M_off, Kd).astype(dtype)
    w_off_p = jnp.pad(w_off, ((0, M_off_p - M_off), (0, Kd_p - Kd)))
    b_off_p = jnp.pad(bias_offset.astype(jnp.float32),
                      (0, M_off_p - M_off)).reshape(M_off_p, 1)

    off_flat = offset_projection(w_off_p, b_off_p, xcol_flat, TL)    # (M_off_p, B*Lp)
    offset = off_flat.reshape(M_off_p, B, Lp).transpose(1, 0, 2)[:, :M_off, :L]
    offset = offset.reshape(B, M_off, out_H, out_W)

    delta = delta + offset
    # NOTE: mirrors the torch reference exactly; only lines up with the output
    # grid for the default K=3 / stride=1 / pad=1 / dilation=1 configuration.
    depth_center = depth[:, :, ::stride, ::stride].reshape(B, 1, L)

    # ---- depth branch (C == 1, cheap): one gather covering all 3 scales -----
    scales = jnp.asarray([0.75, 1.0, 1.25], dtype)
    depth3 = jnp.broadcast_to(depth[None], (3, B, 1, H, W)).reshape(3 * B, 1, H, W)
    base3 = jnp.broadcast_to(base[None], (3,) + base.shape
                             ).reshape((3 * B,) + base.shape[1:])
    delta3 = (delta[None] * scales[:, None, None, None, None]
              ).reshape((3 * B,) + delta.shape[1:])
    d_all = bilinear_unfold(depth3, base3, delta3, K, stride, pad, dilation)  # (3B,KK,L)
    d_all = jnp.abs(d_all.reshape(3, B, KK, L) - depth_center[None])
    d0, d1, d2 = d_all[0], d_all[1], d_all[2]

    # torch.argmin tie-breaking: first index wins
    m0 = jnp.logical_and(d0 <= d1, d0 <= d2)
    m1 = jnp.logical_and(jnp.logical_not(m0), d1 <= d2)
    scale_sel = jnp.where(m0, 0.75, jnp.where(m1, 1.0, 1.25)).astype(dtype)
    # only the winning branch's modulation is ever used
    mod = jnp.exp(-ALPHA * jnp.minimum(d0, jnp.minimum(d1, d2)))      # (B, KK, L)

    # ---- gather x ONCE at the selected coordinates (instead of 3x) ----------
    scale_full = jnp.concatenate([scale_sel, scale_sel], axis=1)      # x & y halves
    delta_sel = delta * scale_full.reshape(B, 2 * KK, out_H, out_W)
    x_col = bilinear_unfold(x, base, delta_sel, K, stride, pad, dilation)  # (B,C*KK,L)

    # modulation broadcast over channels; fused by XLA with the gather epilogue
    xc = (x_col.reshape(B, C, KK, L) * mod[:, None, :, :].astype(dtype)
          ).reshape(B, C * KK, L)
    M = C * KK
    M_p = _round_up(M, _SUBLANE)
    Cout = C
    Cout_p = _round_up(Cout, _SUBLANE)
    xc_p = jnp.pad(xc, ((0, 0), (0, M_p - M), (0, pad_L)))            # lane-dense

    # ---- final weight matmul (Pallas kernel 2) -------------------------------
    w_mat = weight.reshape(Cout, M).astype(dtype)
    w_mat_p = jnp.pad(w_mat, ((0, Cout_p - Cout), (0, M_p - M)))
    out_p = combine_matmul(w_mat_p, xc_p, TL)                         # (B, Cout_p, Lp)
    out = out_p[:, :Cout, :L].reshape(B, Cout, out_H, out_W)
    out = jnp.transpose(out, (0, 2, 3, 1))                            # (B, oH, oW, C)
    return out, depth


# ----------------------------------------------------------------------------
if __name__ == "__main__":
    B, H, W, C = 2, 16, 16, 4
    K, stride, pad, dilation = 3, 1, 1, 1

    key = jax.random.PRNGKey(0)
    k1, k2, k3, k4, k5 = jax.random.split(key, 5)

    # NOTE: the module's init_weight() zeroes weight_offset/bias_offset; we use
    # small deterministic random values so the offset path is non-trivial.
    weight_offset = 0.01 * jax.random.normal(k1, (K * K * 2, C + 1, K, K), jnp.float32)
    bias_offset = 0.01 * jax.random.normal(k2, (K * K * 2,), jnp.float32)
    fan = C * K * K + C
    weight = jax.random.normal(k3, (C, C, K, K), jnp.float32) * (2.0 / fan) ** 0.5
    # self.bias is None (bias=False), so no output bias.

    x_in = jax.random.normal(k4, (B, H, W, C), jnp.float32)
    depth = jax.random.uniform(k5, (B, 1, H, W), jnp.float32, minval=0.5, maxval=3.0)

    out, depth_out = dcnv3_failed_forward(
        x_in, depth, weight_offset, bias_offset, weight,
        K=K, stride=stride, pad=pad, dilation=dilation)
    out = jax.block_until_ready(out)

    out_H = (H + 2 * pad - dilation * (K - 1) - 1) // stride + 1
    out_W = (W + 2 * pad - dilation * (K - 1) - 1) // stride + 1
    assert out.shape == (B, out_H, out_W, C), out.shape
    assert depth_out.shape == (B, 1, H, W)
    assert bool(jnp.all(jnp.isfinite(out)))
    print("KERNEL_OK")
</pallas_src>

<mosaic_0001>
module attributes {stable_mosaic.version = 11 : i64} {
  func.func @_offset_matmul_kernel(%arg0: i32, %arg1: memref<24x48xf32, #tpu.memory_space<vmem>>, %arg2: memref<24x1xf32, #tpu.memory_space<vmem>>, %arg3: memref<48x256xf32, #tpu.memory_space<vmem>>, %arg4: memref<24x256xf32, #tpu.memory_space<vmem>>) attributes {dimension_semantics = [#tpu.dimension_semantics<parallel>], iteration_bounds = array<i64: 2>, scalar_prefetch = 0 : i64, scratch_operands = 0 : i64, tpu.core_type = #tpu.core_type<tc>, window_params = [{pipeline_mode = #tpu.pipeline_mode<synchronous>, transform_indices = @transform_0, window_bounds = array<i64: 24, 48>}, {pipeline_mode = #tpu.pipeline_mode<synchronous>, transform_indices = @transform_1, window_bounds = array<i64: 24, 1>}, {transform_indices = @transform_2, window_bounds = array<i64: 48, 256>}, {transform_indices = @transform_3, window_bounds = array<i64: 24, 256>}]} {
    %c0 = arith.constant 0 : index
    %c0_0 = arith.constant 0 : index
    %0 = vector.load %arg1[%c0, %c0_0] : memref<24x48xf32, #tpu.memory_space<vmem>>, vector<24x48xf32>
    %1 = arith.truncf %0 : vector<24x48xf32> to vector<24x48xbf16>
    %c0_1 = arith.constant 0 : index
    %c0_2 = arith.constant 0 : index
    %2 = vector.load %arg3[%c0_1, %c0_2] : memref<48x256xf32, #tpu.memory_space<vmem>>, vector<48x256xf32>
    %3 = arith.truncf %2 : vector<48x256xf32> to vector<48x256xbf16>
    %cst = arith.constant dense<0.000000e+00> : vector<24x256xf32>
    %4 = tpu.matmul %1, %3, %cst {dimension_numbers = #tpu.dot_dimension_numbers<[1], [0], [0], [1], [0, 0, 1, 1], [], []>} : vector<24x48xbf16>, vector<48x256xbf16>, vector<24x256xf32> -> vector<24x256xf32>
    %c0_3 = arith.constant 0 : index
    %c0_4 = arith.constant 0 : index
    %5 = vector.load %arg2[%c0_3, %c0_4] : memref<24x1xf32, #tpu.memory_space<vmem>>, vector<24x1xf32>
    %6 = vector.broadcast %5 : vector<24x1xf32> to vector<24x256xf32>
    %7 = arith.addf %4, %6 : vector<24x256xf32>
    %c0_5 = arith.constant 0 : index
    %c0_6 = arith.constant 0 : index
    %8 = vector.load %arg4[%c0_5, %c0_6] : memref<24x256xf32, #tpu.memory_space<vmem>>, vector<24x256xf32>
    tpu.vector_store %arg4[%c0_5, %c0_6], %7 {strides = array<i32>} : memref<24x256xf32, #tpu.memory_space<vmem>>, vector<24x256xf32>,
    return
  }
  func.func @transform_0(%arg0: i32) -> (i32, i32) {
    %c0_i32 = arith.constant 0 : i32
    %c0_i32_0 = arith.constant 0 : i32
    %c0_i32_1 = arith.constant 0 : i32
    return %c0_i32, %c0_i32_0 : i32, i32
  }
  func.func @transform_1(%arg0: i32) -> (i32, i32) {
    %c0_i32 = arith.constant 0 : i32
    %c0_i32_0 = arith.constant 0 : i32
    %c0_i32_1 = arith.constant 0 : i32
    return %c0_i32, %c0_i32_0 : i32, i32
  }
  func.func @transform_2(%arg0: i32) -> (i32, i32) {
    %c0_i32 = arith.constant 0 : i32
    %c0_i32_0 = arith.constant 0 : i32
    return %c0_i32, %arg0 : i32, i32
  }
  func.func @transform_3(%arg0: i32) -> (i32, i32) {
    %c0_i32 = arith.constant 0 : i32
    %c0_i32_0 = arith.constant 0 : i32
    return %c0_i32, %arg0 : i32, i32
  }
}

module attributes {stable_mosaic.version = 11 : i64} {
  func.func @_combine_matmul_kernel(%arg0: i32, %arg1: i32, %arg2: memref<8x40xf32, #tpu.memory_space<vmem>>, %arg3: memref<1x40x256xf32, #tpu.memory_space<vmem>>, %arg4: memref<1x8x256xf32, #tpu.memory_space<vmem>>) attributes {dimension_semantics = [#tpu.dimension_semantics<parallel>, #tpu.dimension_semantics<parallel>], iteration_bounds = array<i64: 2, 1>, scalar_prefetch = 0 : i64, scratch_operands = 0 : i64, tpu.core_type = #tpu.core_type<tc>, window_params = [{pipeline_mode = #tpu.pipeline_mode<synchronous>, transform_indices = @transform_0, window_bounds = array<i64: 8, 40>}, {transform_indices = @transform_1, window_bounds = array<i64: 1, 40, 256>}, {transform_indices = @transform_2, window_bounds = array<i64: 1, 8, 256>}]} {
    %c0 = arith.constant 0 : index
    %c0_0 = arith.constant 0 : index
    %0 = vector.load %arg2[%c0, %c0_0] : memref<8x40xf32, #tpu.memory_space<vmem>>, vector<8x40xf32>
    %1 = arith.truncf %0 : vector<8x40xf32> to vector<8x40xbf16>
    %c0_1 = arith.constant 0 : index
    %c0_2 = arith.constant 0 : index
    %c0_3 = arith.constant 0 : index
    %2 = vector.load %arg3[%c0_1, %c0_2, %c0_3] : memref<1x40x256xf32, #tpu.memory_space<vmem>>, vector<1x40x256xf32>
    %3 = vector.shape_cast %2 : vector<1x40x256xf32> to vector<40x256xf32>
    %4 = arith.truncf %3 : vector<40x256xf32> to vector<40x256xbf16>
    %cst = arith.constant dense<0.000000e+00> : vector<8x256xf32>
    %5 = tpu.matmul %1, %4, %cst {dimension_numbers = #tpu.dot_dimension_numbers<[1], [0], [0], [1], [0, 0, 1, 1], [], []>} : vector<8x40xbf16>, vector<40x256xbf16>, vector<8x256xf32> -> vector<8x256xf32>
    %c0_4 = arith.constant 0 : index
    %c0_5 = arith.constant 0 : index
    %c0_6 = arith.constant 0 : index
    %6 = vector.load %arg4[%c0_4, %c0_5, %c0_6] : memref<1x8x256xf32, #tpu.memory_space<vmem>>, vector<1x8x256xf32>
    %7 = vector.shape_cast %6 : vector<1x8x256xf32> to vector<8x256xf32>
    %8 = vector.shape_cast %5 : vector<8x256xf32> to vector<1x8x256xf32>
    tpu.vector_store %arg4[%c0_4, %c0_5, %c0_6], %8 {strides = array<i32>} : memref<1x8x256xf32, #tpu.memory_space<vmem>>, vector<1x8x256xf32>,
    return
  }
  func.func @transform_0(%arg0: i32, %arg1: i32) -> (i32, i32) {
    %c0_i32 = arith.constant 0 : i32
    %c0_i32_0 = arith.constant 0 : i32
    %c0_i32_1 = arith.constant 0 : i32
    return %c0_i32, %c0_i32_0 : i32, i32
  }
  func.func @transform_1(%arg0: i32, %arg1: i32) -> (i32, i32, i32) {
    %c0_i32 = arith.constant 0 : i32
    %c0_i32_0 = arith.constant 0 : i32
    return %arg0, %c0_i32, %arg1 : i32, i32, i32
  }
  func.func @transform_2(%arg0: i32, %arg1: i32) -> (i32, i32, i32) {
    %c0_i32 = arith.constant 0 : i32
    %c0_i32_0 = arith.constant 0 : i32
    return %arg0, %c0_i32, %arg1 : i32, i32, i32
  }
}

</mosaic_0001>

<llo_original>
// kernel: tile.8
$region0: #{tile.8}
  #allocation0 [shape = 's32[1]{0}', space=sflag, size = 0x4, scoped, tag = 'scoped memory for tile.8']
  %s0 = inlined_call_operand.vmem [shape: s32[3], index: 0, kind: input, shape index: {}]
  %s1 = inlined_call_operand.vmem [shape: s32[3,3], index: 1, kind: output, shape index: {}]
  // Predicated region
  $region2: #{tile.8} parent=0 // pred_check
    _
  $region3: #{tile.8} parent=0 // pred_check_branch
    %3 = sbr.rel (0) target = $region5
  $region4: #{tile.8} parent=0 // pred_region
    _
  $region5: #{tile.8} parent=0 // pred_fallthru
    _
  %v4 = vld [vmem:[%s0] ss:$0 sm:$0xff]
  %5 = vst [vmem:[%s1] sm:$0xf] %v4

// kernel: dcnv3_failed_forward.2
$region0: #{dcnv3_failed_forward.2}
  #allocation0 [shape = 'u32[]', space=smem, size = 0x4, offset = 0x4, fixed_abs, tag = 'smem constant byte address 0x4 - core index']
  #allocation1 [shape = 'u32[144,128]{1,0:T(1,128)}', space=vmem, size = 0x12000, scoped, tag = 'internal scratch']
  %s0 = inlined_call_operand.vmem [shape: f32[24,48], index: 0, kind: input, shape index: {}]
  %s1 = inlined_call_operand.vmem [shape: f32[24,1], index: 1, kind: input, shape index: {}]
  %s2 = inlined_call_operand.vmem [shape: f32[48,512], index: 2, kind: input, shape index: {}]
  %s3 = inlined_call_operand.vmem [shape: f32[24,512], index: 3, kind: output, shape index: {}]
  %s4 = sld [smem:[#allocation0]]
  $region87: #{dcnv3_failed_forward.2} parent=0
    _
  %s6 = ssub.s32 1, %s4
  %s7 = scalar_select 0, %s6, %s4
  $region1: #{dcnv3_failed_forward.2} parent=0
    #allocation2 [shape = 'u8[98304]{0}', space=vmem, size = 0x18000, scoped, tag = 'input window, operand 2']
    #allocation3 [shape = 'u8[49152]{0}', space=vmem, size = 0xc000, scoped, tag = 'output window, operand 0']
    loop: start=0, step=1, limit=4
    $region2: #{dcnv3_failed_forward.2} parent=1 // loop_pre_header
      _
    $region3: #{dcnv3_failed_forward.2} parent=1 // loop_header
      %s9 = sphi 0, %s13
      %p10 = scmp.ge.s32.totalorder %s9, 4
      %s17 = sphi 0, %s17
      %s19 = sphi 0, %s17
      %s20 = sphi 0, %s19
      %s34 = sphi 0, %s20
      %s38 = sphi 0, %s38
      %s40 = sphi 0, %s38
      %s41 = sphi 0, %s40
      %s55 = sphi 0, %s41
      %s61 = sphi 0, %s63
      %s64 = sphi 0, %s61
      %s65 = sphi 0, %s64
      %s81 = sphi 0, %s65
      %s87 = sphi 0, %s89
      %s90 = sphi 0, %s87
      %s91 = sphi 0, %s90
      %s107 = sphi 0, %s91
    $region4: #{dcnv3_failed_forward.2} parent=1 // loop_header_branch
      %12 = sbr.rel (%p10) target = $region8
    $region5: #{dcnv3_failed_forward.2} parent=1 // loop_body
      %s14 = ssub.s32 %s9, 1
      %s15 = ssub.s32 %s9, 2
      %s16 = sadd.s32 %s9, 1
      %s18 = sadd.s32 %s17, 1
      %p21 = scmp.eq.s32.totalorder %s9, 1
      %p22 = scmp.ne.s32.totalorder %s17, %s19
      %p23 = scmp.eq.s32.totalorder %s9, 0
      %p24 = por %p22, %p23
      %p25 = scmp.ne.s32.totalorder %s17, %s19
      %p26 = scmp.eq.s32.totalorder %s14, 1
      %p27 = por %p25, %p26
      %p28 = scmp.ne.s32.totalorder %s19, %s20
      %p29 = scmp.eq.s32.totalorder %s14, 0
      %p30 = por %p28, %p29
      %p31 = scmp.ne.s32.totalorder %s19, %s20
      %p32 = scmp.eq.s32.totalorder %s15, 1
      %p33 = por %p31, %p32
      %p35 = scmp.ne.s32.totalorder %s20, %s34
      %p36 = scmp.eq.s32.totalorder %s15, 0
      %p37 = por %p35, %p36
      %s39 = sadd.s32 %s38, 1
      %p42 = scmp.eq.s32.totalorder %s9, 1
      %p43 = scmp.ne.s32.totalorder %s38, %s40
      %p44 = scmp.eq.s32.totalorder %s9, 0
      %p45 = por %p43, %p44
      %p46 = scmp.ne.s32.totalorder %s38, %s40
      %p47 = scmp.eq.s32.totalorder %s14, 1
      %p48 = por %p46, %p47
      %p49 = scmp.ne.s32.totalorder %s40, %s41
      %p50 = scmp.eq.s32.totalorder %s14, 0
      %p51 = por %p49, %p50
      %p52 = scmp.ne.s32.totalorder %s40, %s41
      %p53 = scmp.eq.s32.totalorder %s15, 1
      %p54 = por %p52, %p53
      %p56 = scmp.ne.s32.totalorder %s41, %s55
      %p57 = scmp.eq.s32.totalorder %s15, 0
      %p58 = por %p56, %p57
      %s59 = ssub.s32 %s9, %s16
      %p60 = scmp.eq.s32.totalorder %s59, 0
      %s62 = sadd.s32 %s61, 1
      %s63 = scalar_select %p60, %s61, %s62
      %p66 = pneg %p60
      %p67 = scmp.eq.s32.totalorder %s9, 1
      %p68 = por %p66, %p67
      %p69 = scmp.ne.s32.totalorder %s61, %s64
      %p70 = scmp.eq.s32.totalorder %s9, 0
      %p71 = por %p69, %p70
      %p72 = scmp.ne.s32.totalorder %s61, %s64
      %p73 = scmp.eq.s32.totalorder %s14, 1
      %p74 = por %p72, %p73
      %p75 = scmp.ne.s32.totalorder %s64, %s65
      %p76 = scmp.eq.s32.totalorder %s14, 0
      %p77 = por %p75, %p76
      %p78 = scmp.ne.s32.totalorder %s64, %s65
      %p79 = scmp.eq.s32.totalorder %s15, 1
      %p80 = por %p78, %p79
      %p82 = scmp.ne.s32.totalorder %s65, %s81
      %p83 = scmp.eq.s32.totalorder %s15, 0
      %p84 = por %p82, %p83
      %s85 = ssub.s32 %s9, %s16
      %p86 = scmp.eq.s32.totalorder %s85, 0
      %s88 = sadd.s32 %s87, 1
      %s89 = scalar_select %p86, %s87, %s88
      %p92 = pneg %p86
      %p93 = scmp.eq.s32.totalorder %s9, 1
      %p94 = por %p92, %p93
      %p95 = scmp.ne.s32.totalorder %s87, %s90
      %p96 = scmp.eq.s32.totalorder %s9, 0
      %p97 = por %p95, %p96
      %p98 = scmp.ne.s32.totalorder %s87, %s90
      %p99 = scmp.eq.s32.totalorder %s14, 1
      %p100 = por %p98, %p99
      %p101 = scmp.ne.s32.totalorder %s90, %s91
      %p102 = scmp.eq.s32.totalorder %s14, 0
      %p103 = por %p101, %p102
      %p104 = scmp.ne.s32.totalorder %s90, %s91
      %p105 = scmp.eq.s32.totalorder %s15, 1
      %p106 = por %p104, %p105
      %p108 = scmp.ne.s32.totalorder %s91, %s107
      %p109 = scmp.eq.s32.totalorder %s15, 0
      %p110 = por %p108, %p109
      %p111 = scmp.le.s32.totalorder 1, %s9
      %p112 = scmp.lt.s32.totalorder %s9, 3
      %p113 = pnand %p111, %p112
      %p114 = pneg %p113
      // Predicated region
      $region9: #{dcnv3_failed_forward.2} parent=5 // pred_check
        _
      $region10: #{dcnv3_failed_forward.2} parent=5 // pred_check_branch
        %116 = sbr.rel (%p113) target = $region12
      $region11: #{dcnv3_failed_forward.2} parent=5 // pred_region
        %s117 = ssub.s32 %s9, 1
        // Predicated region
        $region13: #{dcnv3_failed_forward.2} parent=11 // pred_check
          %p118 = pneg %p30
        $region14: #{dcnv3_failed_forward.2} parent=11 // pred_check_branch
          %120 = sbr.rel (%p118) target = $region16
        $region15: #{dcnv3_failed_forward.2} parent=11 // pred_region
          _
        $region16: #{dcnv3_failed_forward.2} parent=11 // pred_fallthru
          _
        // Predicated region
        $region17: #{dcnv3_failed_forward.2} parent=11 // pred_check
          %p121 = pneg %p51
        $region18: #{dcnv3_failed_forward.2} parent=11 // pred_check_branch
          %123 = sbr.rel (%p121) target = $region20
        $region19: #{dcnv3_failed_forward.2} parent=11 // pred_region
          _
        $region20: #{dcnv3_failed_forward.2} parent=11 // pred_fallthru
          _
      $region12: #{dcnv3_failed_forward.2} parent=5 // pred_fallthru
        _
      %p124 = scmp.lt.s32.totalorder %s9, 2
      // Predicated region
      $region21: #{dcnv3_failed_forward.2} parent=5 // pred_check
        %p125 = pneg %p124
      $region22: #{dcnv3_failed_forward.2} parent=5 // pred_check_branch
        %127 = sbr.rel (%p125) target = $region24
      $region23: #{dcnv3_failed_forward.2} parent=5 // pred_region
        // Predicated region
        $region25: #{dcnv3_failed_forward.2} parent=23 // pred_check
          %p128 = pneg %p71
        $region26: #{dcnv3_failed_forward.2} parent=23 // pred_check_branch
          %130 = sbr.rel (%p128) target = $region28
        $region27: #{dcnv3_failed_forward.2} parent=23 // pred_region
          %s131 = sand.u32 %s61, 1
          %s132 = sand.u32 %s61, 1
          %s133 = smul.addr %s132, 96
          %s134 = scalar_lea.vmem [#allocation2], %s133
          %s135 = smul.u32 2, %s9
          %s136 = smul.addr %s135, 8
          %s137 = scalar_lea.vmem %s2, %s136
          // Predicated region
          $region29: #{dcnv3_failed_forward.2} parent=27 // pred_check
            _
          $region30: #{dcnv3_failed_forward.2} parent=27 // pred_check_branch
            %139 = sbr.rel (0) target = $region32
          $region31: #{dcnv3_failed_forward.2} parent=27 // pred_region
            // Predicated region
            $region33: #{dcnv3_failed_forward.2} parent=31 // pred_check
              _
            $region34: #{dcnv3_failed_forward.2} parent=31 // pred_check_branch
              %141 = sbr.rel (0) target = $region36
            $region35: #{dcnv3_failed_forward.2} parent=31 // pred_region
              loop: start=0, step=1, limit=1
              $region37: #{dcnv3_failed_forward.2} parent=35 // loop_pre_header
                _
              $region38: #{dcnv3_failed_forward.2} parent=35 // loop_header
                %s143 = sphi 0, %s147
                %p144 = scmp.ge.s32.totalorder %s143, 1
                %s148 = sphi %s137, %s137
                %s149 = sphi %s134, %s134
              $region39: #{dcnv3_failed_forward.2} parent=35 // loop_header_branch
                %146 = sbr.rel (%p144) target = $region43
              $region40: #{dcnv3_failed_forward.2} parent=35 // loop_body
                %v150 = vld [vmem:[%s148] sm:$0xff]
                %151 = vst [vmem:[%s149] sm:$0xff] %v150
                %v152 = vld [vmem:[%s148 + $0x8] sm:$0xff]
                %153 = vst [vmem:[%s149 + $0x8] sm:$0xff] %v152
                %v154 = vld [vmem:[%s148 + $0x20] sm:$0xff]
                %155 = vst [vmem:[%s149 + $0x10] sm:$0xff] %v154
                %v156 = vld [vmem:[%s148 + $0x28] sm:$0xff]
                %157 = vst [vmem:[%s149 + $0x18] sm:$0xff] %v156
                %v158 = vld [vmem:[%s148 + $0x40] sm:$0xff]
                %159 = vst [vmem:[%s149 + $0x20] sm:$0xff] %v158
                %v160 = vld [vmem:[%s148 + $0x48] sm:$0xff]
                %161 = vst [vmem:[%s149 + $0x28] sm:$0xff] %v160
                %v162 = vld [vmem:[%s148 + $0x60] sm:$0xff]
                %163 = vst [vmem:[%s149 + $0x30] sm:$0xff] %v162
                %v164 = vld [vmem:[%s148 + $0x68] sm:$0xff]
                %165 = vst [vmem:[%s149 + $0x38] sm:$0xff] %v164
                %v166 = vld [vmem:[%s148 + $0x80] sm:$0xff]
                %167 = vst [vmem:[%s149 + $0x40] sm:$0xff] %v166
                %v168 = vld [vmem:[%s148 + $0x88] sm:$0xff]
                %169 = vst [vmem:[%s149 + $0x48] sm:$0xff] %v168
                %v170 = vld [vmem:[%s148 + $0xa0] sm:$0xff]
                %171 = vst [vmem:[%s149 + $0x50] sm:$0xff] %v170
                %v172 = vld [vmem:[%s148 + $0xa8] sm:$0xff]
                %173 = vst [vmem:[%s149 + $0x58] sm:$0xff] %v172
              $region41: #{dcnv3_failed_forward.2} parent=35 // loop_footer
                %s147 = sadd.s32 1, %s143
              $region42: #{dcnv3_failed_forward.2} parent=35 // loop_footer_branch
                %142 = sbr.rel target = $region38
              $region43: #{dcnv3_failed_forward.2} parent=35 // loop_exit
                _
            $region36: #{dcnv3_failed_forward.2} parent=31 // pred_fallthru
              _
            // Predicated region
            $region44: #{dcnv3_failed_forward.2} parent=31 // pred_check
              _
            $region45: #{dcnv3_failed_forward.2} parent=31 // pred_check_branch
              %175 = sbr.rel target = $region47
            $region46: #{dcnv3_failed_forward.2} parent=31 // pred_region
              _
            $region47: #{dcnv3_failed_forward.2} parent=31 // pred_fallthru
              _
          $region32: #{dcnv3_failed_forward.2} parent=27 // pred_fallthru
            _
          %176 = vnop
        $region28: #{dcnv3_failed_forward.2} parent=23 // pred_fallthru
          _
      $region24: #{dcnv3_failed_forward.2} parent=5 // pred_fallthru
        _
      %p177 = scmp.le.s32.totalorder 1, %s9
      %p178 = scmp.lt.s32.totalorder %s9, 3
      %p179 = pnand %p177, %p178
      %p180 = pneg %p179
      // Predicated region
      $region48: #{dcnv3_failed_forward.2} parent=5 // pred_check
        _
      $region49: #{dcnv3_failed_forward.2} parent=5 // pred_check_branch
        %182 = sbr.rel (%p179) target = $region51
      $region50: #{dcnv3_failed_forward.2} parent=5 // pred_region
        %s183 = ssub.s32 %s9, 1
        %s184 = sand.u32 %s64, 1
        %s185 = sand.u32 %s64, 1
        %s186 = smul.addr %s185, 96
        %s187 = scalar_lea.vmem [#allocation2], %s186
        // Predicated region
        $region52: #{dcnv3_failed_forward.2} parent=50 // pred_check
          %p188 = pneg %p77
        $region53: #{dcnv3_failed_forward.2} parent=50 // pred_check_branch
          %190 = sbr.rel (%p188) target = $region55
        $region54: #{dcnv3_failed_forward.2} parent=50 // pred_region
          _
        $region55: #{dcnv3_failed_forward.2} parent=50 // pred_fallthru
          _
        %p191 = pneg %p30
        %p192 = pneg %p27
        %p193 = pneg %p51
        %p194 = pneg %p48
        %s195 = sand.u32 %s64, 1
        %s196 = sand.u32 %s64, 1
        %s197 = smul.addr %s196, 96
        %s198 = scalar_lea.vmem [#allocation2], %s197
        %p199 = pneg %p77
        %p200 = pneg %p74
        %p201 = pneg %p103
        %p202 = pneg %p100
        %s203 = sand.u32 %s90, 1
        %s204 = sand.u32 %s90, 1
        %s205 = smul.addr %s204, 48
        %s206 = scalar_lea.vmem [#allocation3], %s205
        %s207 = smul.u32 2, %s14
        %s208 = smul.u32 2, %s14
        %v210 = vld [vmem:[%s0] sm:$0xff]
        %v211 = vld [vmem:[%s0 + $0x8] sm:$0xff]
        %v212 = vld [vmem:[%s0 + $0x10] sm:$0xff]
        %v213 = vpack.c.bf16 %v211, %v210
        %v214 = vpack.c.bf16 %v212, %v212
        %v215 = vld [vmem:[%s187] sm:$0xff]
        %v216 = vld [vmem:[%s187 + $0x8] sm:$0xff]
        %v217 = vld [vmem:[%s187 + $0x10] sm:$0xff]
        %v218 = vld [vmem:[%s187 + $0x18] sm:$0xff]
        %v219 = vld [vmem:[%s187 + $0x20] sm:$0xff]
        %v220 = vld [vmem:[%s187 + $0x28] sm:$0xff]
        %v221 = vld [vmem:[%s187 + $0x30] sm:$0xff]
        %v222 = vld [vmem:[%s187 + $0x38] sm:$0xff]
        %v223 = vld [vmem:[%s187 + $0x40] sm:$0xff]
        %v224 = vld [vmem:[%s187 + $0x48] sm:$0xff]
        %v225 = vld [vmem:[%s187 + $0x50] sm:$0xff]
        %v226 = vld [vmem:[%s187 + $0x58] sm:$0xff]
        %v227 = vpack.c.bf16 %v217, %v215
        %v228 = vpack.c.bf16 %v218, %v216
        %v229 = vpack.c.bf16 %v221, %v219
        %v230 = vpack.c.bf16 %v222, %v220
        %v231 = vpack.c.bf16 %v225, %v223
        %v232 = vpack.c.bf16 %v226, %v224
        %v233 = vld [vmem:[%s1] sm:$0xff]
        %v234 = vld [vmem:[%s1 + $0x8] sm:$0xff]
        %v235 = vld [vmem:[%s1 + $0x10] sm:$0xff]
        %237 = vset.pattern.permute.xlu0 0
        %238 = vperm.xlu0 %237, %v233
        %v239 = vpop.permute.xlu0 %238
        %242 = vset.pattern.permute.xlu0 0
        %243 = vperm.xlu0 %242, %v234
        %v244 = vpop.permute.xlu0 %243
        %247 = vset.pattern.permute.xlu0 0
        %248 = vperm.xlu0 %247, %v235
        %v249 = vpop.permute.xlu0 %248
        %vm251 = vcmask 392192
        %v253 = vsel %vm251, %v213, 0
        %v256 = vsel %vm251, %v214, 0
        %258 = vmatprep.subr.bf16.mxu0 %v228
        %259 = vmatpush1.bf16.msra.mxu0 %v227
        %260 = vmatprep.subr.bf16.mxu0 %v230
        %261 = vmatpush1.bf16.msra.mxu0 %v229
        %262 = vmatprep.subr.bf16.mxu0 %v232
        %263 = vmatpush1.bf16.msra.mxu0 %v231
        %264 = vmatprep.subr.bf16.mxu0 0
        %265 = vmatpush1.bf16.msra.mxu0 0
        %266 = vmatprep.subr.bf16.mxu0 0
        %267 = vmatpush1.bf16.msra.mxu0 0
        %268 = vmatprep.subr.bf16.mxu0 0
        %269 = vmatpush1.bf16.msra.mxu0 0
        %270 = vmatprep.subr.bf16.mxu0 0
        %271 = vmatpush1.bf16.msra.mxu0 0
        %272 = vmatprep.subr.bf16.mxu0 0
        %273 = vmatpush1.bf16.msra.mxu0 0
        %274 = vmatprep.subr.bf16.mxu0 0
        %275 = vmatpush1.bf16.msra.mxu0 0
        %276 = vmatprep.subr.bf16.mxu0 0
        %277 = vmatpush1.bf16.msra.mxu0 0
        %278 = vmatprep.subr.bf16.mxu0 0
        %279 = vmatpush1.bf16.msra.mxu0 0
        %280 = vmatprep.subr.bf16.mxu0 0
        %281 = vmatpush1.bf16.msra.mxu0 0
        %282 = vmatprep.subr.bf16.mxu0 0
        %283 = vmatpush1.bf16.msra.mxu0 0
        %284 = vmatprep.subr.bf16.mxu0 0
        %285 = vmatpush1.bf16.msra.mxu0 0
        %286 = vmatprep.subr.bf16.mxu0 0
        %287 = vmatpush1.bf16.msra.mxu0 0
        %288 = vmatprep.subr.bf16.mxu0 0
        %289 = vmatpush1.bf16.msra.mxu0 0
        %290 = vmatprep.mubr.bf16.mxu0 0
        %291 = vmatmul.mubr.bf16.gmra.mrb[0].mxu0 %v253
        %v292 = vpop.f32.mrb[0].mxu0
        %v293 = vadd.f32 %v239, %v292
        %v294 = vpop.f32.mrb[0].mxu0
        %v295 = vadd.f32 %v239, %v294
        %v296 = vpop.f32.mrb[0].mxu0
        %v297 = vadd.f32 %v244, %v296
        %v298 = vpop.f32.mrb[0].mxu0
        %v299 = vadd.f32 %v244, %v298
        %300 = vmatprep.mubr.bf16.mxu0 0
        %301 = vmatmul.mubr.bf16.gmra.mrb[0].mxu0 %v256
        %v302 = vpop.f32.mrb[0].mxu0
        %v303 = vadd.f32 %v249, %v302
        %v304 = vpop.f32.mrb[0].mxu0
        %v305 = vadd.f32 %v249, %v304
        %v306 = vpop.f32.mrb[0].mxu0
        %v307 = vpop.f32.mrb[0].mxu0
        %308 = vdwg.mxu0
        %309 = vst [vmem:[%s206] sm:$0xff] %v293
        %310 = vst [vmem:[%s206 + $0x8] sm:$0xff] %v295
        %311 = vst [vmem:[%s206 + $0x10] sm:$0xff] %v297
        %312 = vst [vmem:[%s206 + $0x18] sm:$0xff] %v299
        %313 = vst [vmem:[%s206 + $0x20] sm:$0xff] %v303
        %314 = vst [vmem:[%s206 + $0x28] sm:$0xff] %v305
        %s315 = sand.u32 %s90, 1
        %s316 = sand.u32 %s90, 1
        %s317 = smul.addr %s316, 48
        %s318 = scalar_lea.vmem [#allocation3], %s317
        // Predicated region
        $region56: #{dcnv3_failed_forward.2} parent=50 // pred_check
          %p319 = pneg %p100
        $region57: #{dcnv3_failed_forward.2} parent=50 // pred_check_branch
          %321 = sbr.rel (%p319) target = $region59
        $region58: #{dcnv3_failed_forward.2} parent=50 // pred_region
          %s322 = smul.u32 2, %s14
          %s323 = smul.addr %s322, 8
          %s324 = scalar_lea.vmem %s3, %s323
          // Predicated region
          $region60: #{dcnv3_failed_forward.2} parent=58 // pred_check
            _
          $region61: #{dcnv3_failed_forward.2} parent=58 // pred_check_branch
            %326 = sbr.rel (0) target = $region63
          $region62: #{dcnv3_failed_forward.2} parent=58 // pred_region
            // Predicated region
            $region64: #{dcnv3_failed_forward.2} parent=62 // pred_check
              _
            $region65: #{dcnv3_failed_forward.2} parent=62 // pred_check_branch
              %328 = sbr.rel (0) target = $region67
            $region66: #{dcnv3_failed_forward.2} parent=62 // pred_region
              loop: start=0, step=1, limit=1
              $region68: #{dcnv3_failed_forward.2} parent=66 // loop_pre_header
                _
              $region69: #{dcnv3_failed_forward.2} parent=66 // loop_header
                %s330 = sphi 0, %s334
                %p331 = scmp.ge.s32.totalorder %s330, 1
                %s335 = sphi %s318, %s318
                %s336 = sphi %s324, %s324
              $region70: #{dcnv3_failed_forward.2} parent=66 // loop_header_branch
                %333 = sbr.rel (%p331) target = $region74
              $region71: #{dcnv3_failed_forward.2} parent=66 // loop_body
                %v337 = vld [vmem:[%s335] sm:$0xff]
                %338 = vst [vmem:[%s336] sm:$0xff] %v337
                %v339 = vld [vmem:[%s335 + $0x8] sm:$0xff]
                %340 = vst [vmem:[%s336 + $0x8] sm:$0xff] %v339
                %v341 = vld [vmem:[%s335 + $0x10] sm:$0xff]
                %342 = vst [vmem:[%s336 + $0x20] sm:$0xff] %v341
                %v343 = vld [vmem:[%s335 + $0x18] sm:$0xff]
                %344 = vst [vmem:[%s336 + $0x28] sm:$0xff] %v343
                %v345 = vld [vmem:[%s335 + $0x20] sm:$0xff]
                %346 = vst [vmem:[%s336 + $0x40] sm:$0xff] %v345
                %v347 = vld [vmem:[%s335 + $0x28] sm:$0xff]
                %348 = vst [vmem:[%s336 + $0x48] sm:$0xff] %v347
              $region72: #{dcnv3_failed_forward.2} parent=66 // loop_footer
                %s334 = sadd.s32 1, %s330
              $region73: #{dcnv3_failed_forward.2} parent=66 // loop_footer_branch
                %329 = sbr.rel target = $region69
              $region74: #{dcnv3_failed_forward.2} parent=66 // loop_exit
                _
            $region67: #{dcnv3_failed_forward.2} parent=62 // pred_fallthru
              _
            // Predicated region
            $region75: #{dcnv3_failed_forward.2} parent=62 // pred_check
              _
            $region76: #{dcnv3_failed_forward.2} parent=62 // pred_check_branch
              %350 = sbr.rel target = $region78
            $region77: #{dcnv3_failed_forward.2} parent=62 // pred_region
              _
            $region78: #{dcnv3_failed_forward.2} parent=62 // pred_fallthru
              _
          $region63: #{dcnv3_failed_forward.2} parent=58 // pred_fallthru
            _
          %351 = vnop
        $region59: #{dcnv3_failed_forward.2} parent=50 // pred_fallthru
          _
      $region51: #{dcnv3_failed_forward.2} parent=5 // pred_fallthru
        _
      %p352 = scmp.le.s32.totalorder 2, %s9
      // Predicated region
      $region79: #{dcnv3_failed_forward.2} parent=5 // pred_check
        %p353 = pneg %p352
      $region80: #{dcnv3_failed_forward.2} parent=5 // pred_check_branch
        %355 = sbr.rel (%p353) target = $region82
      $region81: #{dcnv3_failed_forward.2} parent=5 // pred_region
        %s356 = ssub.s32 %s9, 2
        // Predicated region
        $region83: #{dcnv3_failed_forward.2} parent=81 // pred_check
          %p357 = pneg %p106
        $region84: #{dcnv3_failed_forward.2} parent=81 // pred_check_branch
          %359 = sbr.rel (%p357) target = $region86
        $region85: #{dcnv3_failed_forward.2} parent=81 // pred_region
          %s360 = sand.u32 %s91, 1
          %s361 = sand.u32 %s91, 1
          %s362 = smul.addr %s361, 48
          %s363 = scalar_lea.vmem [#allocation3], %s362
        $region86: #{dcnv3_failed_forward.2} parent=81 // pred_fallthru
          _
      $region82: #{dcnv3_failed_forward.2} parent=5 // pred_fallthru
        _
    $region6: #{dcnv3_failed_forward.2} parent=1 // loop_footer
      %s13 = sadd.s32 1, %s9
    $region7: #{dcnv3_failed_forward.2} parent=1 // loop_footer_branch
      %8 = sbr.rel target = $region3
    $region8: #{dcnv3_failed_forward.2} parent=1 // loop_exit
      _

// kernel: sub.41
$region0: #{sub.41}
  %s0 = inlined_call_operand.vmem [shape: f32[2,1,16,16], index: 0, kind: input, shape index: {}]
  %s1 = inlined_call_operand.vmem [shape: f32[2,256], index: 1, kind: output, shape index: {}]
  $region1: #{sub.41} parent=0
    #allocation0 [shape = 'u8[8192]{0}', space=vmem, size = 0x2000, scoped, tag = 'scoped mem for output reshape']
    %v2 = vld [vmem:[%s0] ss:$8 sm:$0xf]
    %vm3 = vcmask 130048
    %4 = vst.msk [vmem:[#allocation0] ss:$8 sm:$0x3] %vm3, %v2
    %s5 = scalar_lea.vmem [#allocation0], 4294967281
    %6 = vst.msk [vmem:[%s5] ss:$8 sm:$0xc] %vm3, %v2
    %s7 = scalar_lea.vmem %s0, 7
    %s8 = smov 3
    %v9 = vld [vmem:[%s7] ss:$16 sm:%s8]
    %s10 = scalar_lea.vmem %s0, 4294967279
    %s11 = smov 12
    %v12 = vld [vmem:[%s10] ss:$16 sm:%s11]
    %vm13 = vcmask 1043458
    %v14 = vsel %vm13, %v12, %v9
    %15 = vrot.lane.b32.xlu0 %v14, 112
    %v16 = vpop.permute.xlu0 %15
    %vm17 = vcmask 1048448
    %18 = vst.msk [vmem:[#allocation0] sm:$0x3] %vm17, %v16
    %s19 = scalar_lea.vmem [#allocation0], 6
    %20 = vst.msk [vmem:[%s19] sm:$0xc] %vm17, %v16
    %s21 = scalar_lea.vmem %s0, 6
    %s22 = smov 3
    %v23 = vld [vmem:[%s21] ss:$16 sm:%s22]
    %s24 = scalar_lea.vmem %s0, 4294967278
    %s25 = smov 12
    %v26 = vld [vmem:[%s24] ss:$16 sm:%s25]
    %vm27 = vcmask 1043458
    %v28 = vsel %vm27, %v26, %v23
    %29 = vrot.lane.b32.xlu0 %v28, 96
    %v30 = vpop.permute.xlu0 %29
    %vm31 = vcmask 917248
    %32 = vst.msk [vmem:[#allocation0] sm:$0x3] %vm31, %v30
    %s33 = scalar_lea.vmem [#allocation0], 6
    %34 = vst.msk [vmem:[%s33] sm:$0xc] %vm31, %v30
    %s35 = scalar_lea.vmem %s0, 5
    %s36 = smov 3
    %v37 = vld [vmem:[%s35] ss:$16 sm:%s36]
    %s38 = scalar_lea.vmem %s0, 4294967277
    %s39 = smov 12
    %v40 = vld [vmem:[%s38] ss:$16 sm:%s39]
    %vm41 = vcmask 1043458
    %v42 = vsel %vm41, %v40, %v37
    %43 = vrot.lane.b32.xlu0 %v42, 80
    %v44 = vpop.permute.xlu0 %43
    %vm45 = vcmask 786048
    %46 = vst.msk [vmem:[#allocation0] sm:$0x3] %vm45, %v44
    %s47 = scalar_lea.vmem [#allocation0], 6
    %48 = vst.msk [vmem:[%s47] sm:$0xc] %vm45, %v44
    %s49 = scalar_lea.vmem %s0, 4
    %s50 = smov 3
    %v51 = vld [vmem:[%s49] ss:$16 sm:%s50]
    %s52 = scalar_lea.vmem %s0, 4294967276
    %s53 = smov 12
    %v54 = vld [vmem:[%s52] ss:$16 sm:%s53]
    %vm55 = vcmask 1043458
    %v56 = vsel %vm55, %v54, %v51
    %57 = vrot.lane.b32.xlu0 %v56, 64
    %v58 = vpop.permute.xlu0 %57
    %vm59 = vcmask 654848
    %60 = vst.msk [vmem:[#allocation0] sm:$0x3] %vm59, %v58
    %s61 = scalar_lea.vmem [#allocation0], 6
    %62 = vst.msk [vmem:[%s61] sm:$0xc] %vm59, %v58
    %s63 = scalar_lea.vmem %s0, 3
    %s64 = smov 3
    %v65 = vld [vmem:[%s63] ss:$16 sm:%s64]
    %s66 = scalar_lea.vmem %s0, 4294967275
    %s67 = smov 12
    %v68 = vld [vmem:[%s66] ss:$16 sm:%s67]
    %vm69 = vcmask 1043458
    %v70 = vsel %vm69, %v68, %v65
    %71 = vrot.lane.b32.xlu0 %v70, 48
    %v72 = vpop.permute.xlu0 %71
    %vm73 = vcmask 523648
    %74 = vst.msk [vmem:[#allocation0] sm:$0x3] %vm73, %v72
    %s75 = scalar_lea.vmem [#allocation0], 6
    %76 = vst.msk [vmem:[%s75] sm:$0xc] %vm73, %v72
    %s77 = scalar_lea.vmem %s0, 2
    %s78 = smov 3
    %v79 = vld [vmem:[%s77] ss:$16 sm:%s78]
    %s80 = scalar_lea.vmem %s0, 4294967274
    %s81 = smov 12
    %v82 = vld [vmem:[%s80] ss:$16 sm:%s81]
    %vm83 = vcmask 1043458
    %v84 = vsel %vm83, %v82, %v79
    %85 = vrot.lane.b32.xlu0 %v84, 32
    %v86 = vpop.permute.xlu0 %85
    %vm87 = vcmask 392448
    %88 = vst.msk [vmem:[#allocation0] sm:$0x3] %vm87, %v86
    %s89 = scalar_lea.vmem [#allocation0], 6
    %90 = vst.msk [vmem:[%s89] sm:$0xc] %vm87, %v86
    %s91 = scalar_lea.vmem %s0, 1
    %s92 = smov 3
    %v93 = vld [vmem:[%s91] ss:$16 sm:%s92]
    %s94 = scalar_lea.vmem %s0, 4294967273
    %s95 = smov 12
    %v96 = vld [vmem:[%s94] ss:$16 sm:%s95]
    %vm97 = vcmask 1043458
    %v98 = vsel %vm97, %v96, %v93
    %99 = vrot.lane.b32.xlu0 %v98, 16
    %v100 = vpop.permute.xlu0 %99
    %vm101 = vcmask 261248
    %102 = vst.msk [vmem:[#allocation0] sm:$0x3] %vm101, %v100
    %s103 = scalar_lea.vmem [#allocation0], 6
    %104 = vst.msk [vmem:[%s103] sm:$0xc] %vm101, %v100
    %s106 = sshllo.u32 0, 2
    %v108 = vld [vmem:[#allocation0] sm:%s106]
    %s109 = sshllo.u32 0, 2
    %110 = vst [vmem:[%s1] sm:%s109] %v108
    %s111 = scalar_lea.vmem [#allocation0], 8
    %v112 = vld [vmem:[%s111] sm:%s106]
    %s113 = sshllo.u32 0, 2
    %s114 = scalar_lea.vmem %s1, 2
    %115 = vst [vmem:[%s114] sm:%s113] %v112

// kernel: dcnv3_failed_forward.3
$region0: #{dcnv3_failed_forward.3}
  #allocation0 [shape = 'u32[]', space=smem, size = 0x4, offset = 0x4, fixed_abs, tag = 'smem constant byte address 0x4 - core index']
  #allocation1 [shape = 'u32[144,128]{1,0:T(1,128)}', space=vmem, size = 0x12000, scoped, tag = 'internal scratch']
  %s0 = inlined_call_operand.vmem [shape: f32[8,40], index: 0, kind: input, shape index: {}]
  %s1 = inlined_call_operand.vmem [shape: f32[2,40,256], index: 1, kind: input, shape index: {}]
  %s2 = inlined_call_operand.vmem [shape: f32[2,8,256], index: 2, kind: output, shape index: {}]
  %s3 = sld [smem:[#allocation0]]
  $region41: #{dcnv3_failed_forward.3} parent=0
    _
  %s5 = ssub.s32 1, %s3
  %s6 = scalar_select 0, %s5, %s3
  loop: start=0, step=1, limit=4
  $region2: #{dcnv3_failed_forward.3} parent=0 // loop_pre_header
    _
  $region3: #{dcnv3_failed_forward.3} parent=0 // loop_header
    %s8 = sphi 0, %s12
    %p9 = scmp.ge.s32.totalorder %s8, 4
    %s15 = sphi 0, %s27
    %s16 = sphi 0, %s23
    %s17 = sphi 0, %s15
    %s18 = sphi 0, %s16
    %s19 = sphi 0, %s17
    %s20 = sphi 0, %s18
    %s28 = sphi 0, %s28
    %s30 = sphi 0, %s28
    %s31 = sphi 0, %s30
    %s45 = sphi 0, %s31
    %s53 = sphi 0, %s55
    %s56 = sphi 0, %s53
    %s57 = sphi 0, %s56
    %s73 = sphi 0, %s57
    %s81 = sphi 0, %s83
    %s84 = sphi 0, %s81
    %s85 = sphi 0, %s84
    %s101 = sphi 0, %s85
  $region4: #{dcnv3_failed_forward.3} parent=0 // loop_header_branch
    %11 = sbr.rel (%p9) target = $region8
  $region5: #{dcnv3_failed_forward.3} parent=0 // loop_body
    %s13 = ssub.s32 %s8, 1
    %s14 = ssub.s32 %s8, 2
    %s21 = sadd.s32 1, %s16
    %p22 = scmp.ge.s32.totalorder %s21, 1
    %s23 = scalar_select %p22, 0, %s21
    %s24 = sadd.s32 1, %s15
    %s25 = scalar_select %p22, %s24, %s15
    %p26 = scmp.ge.s32.totalorder %s25, 2
    %s27 = scalar_select %p26, 0, %s25
    %s29 = sadd.s32 %s28, 1
    %p32 = scmp.eq.s32.totalorder %s8, 1
    %p33 = scmp.ne.s32.totalorder %s28, %s30
    %p34 = scmp.eq.s32.totalorder %s8, 0
    %p35 = por %p33, %p34
    %p36 = scmp.ne.s32.totalorder %s28, %s30
    %p37 = scmp.eq.s32.totalorder %s13, 1
    %p38 = por %p36, %p37
    %p39 = scmp.ne.s32.totalorder %s30, %s31
    %p40 = scmp.eq.s32.totalorder %s13, 0
    %p41 = por %p39, %p40
    %p42 = scmp.ne.s32.totalorder %s30, %s31
    %p43 = scmp.eq.s32.totalorder %s14, 1
    %p44 = por %p42, %p43
    %p46 = scmp.ne.s32.totalorder %s31, %s45
    %p47 = scmp.eq.s32.totalorder %s14, 0
    %p48 = por %p46, %p47
    %s49 = ssub.s32 %s15, %s27
    %s50 = ssub.s32 %s16, %s23
    %s51 = sor.u32 %s49, %s50
    %p52 = scmp.eq.s32.totalorder %s51, 0
    %s54 = sadd.s32 %s53, 1
    %s55 = scalar_select %p52, %s53, %s54
    %p58 = pneg %p52
    %p59 = scmp.eq.s32.totalorder %s8, 1
    %p60 = por %p58, %p59
    %p61 = scmp.ne.s32.totalorder %s53, %s56
    %p62 = scmp.eq.s32.totalorder %s8, 0
    %p63 = por %p61, %p62
    %p64 = scmp.ne.s32.totalorder %s53, %s56
    %p65 = scmp.eq.s32.totalorder %s13, 1
    %p66 = por %p64, %p65
    %p67 = scmp.ne.s32.totalorder %s56, %s57
    %p68 = scmp.eq.s32.totalorder %s13, 0
    %p69 = por %p67, %p68
    %p70 = scmp.ne.s32.totalorder %s56, %s57
    %p71 = scmp.eq.s32.totalorder %s14, 1
    %p72 = por %p70, %p71
    %p74 = scmp.ne.s32.totalorder %s57, %s73
    %p75 = scmp.eq.s32.totalorder %s14, 0
    %p76 = por %p74, %p75
    %s77 = ssub.s32 %s15, %s27
    %s78 = ssub.s32 %s16, %s23
    %s79 = sor.u32 %s77, %s78
    %p80 = scmp.eq.s32.totalorder %s79, 0
    %s82 = sadd.s32 %s81, 1
    %s83 = scalar_select %p80, %s81, %s82
    %p86 = pneg %p80
    %p87 = scmp.eq.s32.totalorder %s8, 1
    %p88 = por %p86, %p87
    %p89 = scmp.ne.s32.totalorder %s81, %s84
    %p90 = scmp.eq.s32.totalorder %s8, 0
    %p91 = por %p89, %p90
    %p92 = scmp.ne.s32.totalorder %s81, %s84
    %p93 = scmp.eq.s32.totalorder %s13, 1
    %p94 = por %p92, %p93
    %p95 = scmp.ne.s32.totalorder %s84, %s85
    %p96 = scmp.eq.s32.totalorder %s13, 0
    %p97 = por %p95, %p96
    %p98 = scmp.ne.s32.totalorder %s84, %s85
    %p99 = scmp.eq.s32.totalorder %s14, 1
    %p100 = por %p98, %p99
    %p102 = scmp.ne.s32.totalorder %s85, %s101
    %p103 = scmp.eq.s32.totalorder %s14, 0
    %p104 = por %p102, %p103
    %p105 = scmp.le.s32.totalorder 1, %s8
    %p106 = scmp.lt.s32.totalorder %s8, 3
    %p107 = pnand %p105, %p106
    %p108 = pneg %p107
    // Predicated region
    $region9: #{dcnv3_failed_forward.3} parent=5 // pred_check
      _
    $region10: #{dcnv3_failed_forward.3} parent=5 // pred_check_branch
      %110 = sbr.rel (%p107) target = $region12
    $region11: #{dcnv3_failed_forward.3} parent=5 // pred_region
      %s111 = ssub.s32 %s8, 1
      // Predicated region
      $region13: #{dcnv3_failed_forward.3} parent=11 // pred_check
        %p112 = pneg %p41
      $region14: #{dcnv3_failed_forward.3} parent=11 // pred_check_branch
        %114 = sbr.rel (%p112) target = $region16
      $region15: #{dcnv3_failed_forward.3} parent=11 // pred_region
        _
      $region16: #{dcnv3_failed_forward.3} parent=11 // pred_fallthru
        _
    $region12: #{dcnv3_failed_forward.3} parent=5 // pred_fallthru
      _
    %p115 = scmp.lt.s32.totalorder %s8, 2
    // Predicated region
    $region17: #{dcnv3_failed_forward.3} parent=5 // pred_check
      %p116 = pneg %p115
    $region18: #{dcnv3_failed_forward.3} parent=5 // pred_check_branch
      %118 = sbr.rel (%p116) target = $region20
    $region19: #{dcnv3_failed_forward.3} parent=5 // pred_region
      // Predicated region
      $region21: #{dcnv3_failed_forward.3} parent=19 // pred_check
        %p119 = pneg %p63
      $region22: #{dcnv3_failed_forward.3} parent=19 // pred_check_branch
        %121 = sbr.rel (%p119) target = $region24
      $region23: #{dcnv3_failed_forward.3} parent=19 // pred_region
        %s122 = smul.u32 2, %s16
        %p123 = scmp.lt.s32.totalorder %s15, 1
        %s124 = scalar_select %p123, %s15, 1
        %p125 = scmp.lt.s32.totalorder %s122, 1
        %s126 = scalar_select %p125, %s122, 1
        %s127 = smul.addr %s124, 10
        %s128 = sadd.s32 %s126, %s127
        %s129 = smul.addr %s128, 8
        %s130 = scalar_lea.vmem %s1, %s129
        %s131 = smul.u32 2, %s16
      $region24: #{dcnv3_failed_forward.3} parent=19 // pred_fallthru
        _
    $region20: #{dcnv3_failed_forward.3} parent=5 // pred_fallthru
      _
    %p132 = scmp.le.s32.totalorder 1, %s8
    %p133 = scmp.lt.s32.totalorder %s8, 3
    %p134 = pnand %p132, %p133
    %p135 = pneg %p134
    // Predicated region
    $region25: #{dcnv3_failed_forward.3} parent=5 // pred_check
      _
    $region26: #{dcnv3_failed_forward.3} parent=5 // pred_check_branch
      %137 = sbr.rel (%p134) target = $region28
    $region27: #{dcnv3_failed_forward.3} parent=5 // pred_region
      %s138 = ssub.s32 %s8, 1
      %p139 = pneg %p41
      %p140 = pneg %p38
      %s141 = smul.u32 2, %s18
      %p142 = scmp.lt.s32.totalorder %s17, 1
      %s143 = scalar_select %p142, %s17, 1
      %p144 = scmp.lt.s32.totalorder %s141, 1
      %s145 = scalar_select %p144, %s141, 1
      %s146 = smul.addr %s143, 10
      %s147 = sadd.s32 %s145, %s146
      %s148 = smul.addr %s147, 8
      %s149 = scalar_lea.vmem %s1, %s148
      %p150 = pneg %p69
      %p151 = pneg %p66
      %p152 = pneg %p97
      %p153 = pneg %p94
      %s154 = smul.u32 2, %s18
      %p155 = scmp.lt.s32.totalorder %s17, 1
      %s156 = scalar_select %p155, %s17, 1
      %p157 = scmp.lt.s32.totalorder %s154, 1
      %s158 = scalar_select %p157, %s154, 1
      %s159 = smul.addr %s156, 2
      %s160 = sadd.s32 %s158, %s159
      %s161 = smul.addr %s160, 8
      %s162 = scalar_lea.vmem %s2, %s161
      %s163 = smul.u32 2, %s18
      %p164 = scmp.lt.s32.totalorder %s17, 1
      %s165 = scalar_select %p164, %s17, 1
      %p166 = scmp.lt.s32.totalorder %s163, 1
      %s167 = scalar_select %p166, %s163, 1
      %s168 = smul.addr %s165, 10
      %s169 = sadd.s32 %s167, %s168
      %s170 = smul.addr %s169, 8
      %s171 = scalar_lea.vmem %s1, %s170
      %s172 = smul.u32 2, %s18
      %s173 = smul.u32 2, %s18
      %p174 = scmp.lt.s32.totalorder %s17, 1
      %s175 = scalar_select %p174, %s17, 1
      %p176 = scmp.lt.s32.totalorder %s173, 1
      %s177 = scalar_select %p176, %s173, 1
      %s178 = smul.addr %s175, 2
      %s179 = sadd.s32 %s177, %s178
      %s180 = smul.addr %s179, 8
      %s181 = scalar_lea.vmem %s2, %s180
      %s182 = smul.u32 2, %s18
      %v184 = vld [vmem:[%s0] sm:$0xff]
      %v185 = vpack.c.bf16 %v184, %v184
      %v186 = vld [vmem:[%s171] sm:$0xff]
      %v187 = vld [vmem:[%s171 + $0x8] sm:$0xff]
      %v188 = vld [vmem:[%s171 + $0x10] sm:$0xff]
      %v189 = vld [vmem:[%s171 + $0x18] sm:$0xff]
      %v190 = vld [vmem:[%s171 + $0x20] sm:$0xff]
      %v191 = vld [vmem:[%s171 + $0x28] sm:$0xff]
      %v192 = vld [vmem:[%s171 + $0x30] sm:$0xff]
      %v193 = vld [vmem:[%s171 + $0x38] sm:$0xff]
      %v194 = vld [vmem:[%s171 + $0x40] sm:$0xff]
      %v195 = vld [vmem:[%s171 + $0x48] sm:$0xff]
      %v196 = vpack.c.bf16 %v188, %v186
      %v197 = vpack.c.bf16 %v189, %v187
      %v198 = vpack.c.bf16 %v192, %v190
      %v199 = vpack.c.bf16 %v193, %v191
      %v200 = vpack.c.bf16 %v194, %v194
      %v201 = vpack.c.bf16 %v195, %v195
      %vm202 = vcmask 326656
      %v204 = vsel %vm202, %v185, 0
      %vm206 = vcmask 1043456
      %v208 = vsel %vm206, %v200, 0
      %v211 = vsel %vm206, %v201, 0
      %213 = vmatprep.subr.bf16.mxu0 %v197
      %214 = vmatpush1.bf16.msra.mxu0 %v196
      %215 = vmatprep.subr.bf16.mxu0 %v199
      %216 = vmatpush1.bf16.msra.mxu0 %v198
      %217 = vmatprep.subr.bf16.mxu0 %v211
      %218 = vmatpush1.bf16.msra.mxu0 %v208
      %219 = vmatprep.subr.bf16.mxu0 0
      %220 = vmatpush1.bf16.msra.mxu0 0
      %221 = vmatprep.subr.bf16.mxu0 0
      %222 = vmatpush1.bf16.msra.mxu0 0
      %223 = vmatprep.subr.bf16.mxu0 0
      %224 = vmatpush1.bf16.msra.mxu0 0
      %225 = vmatprep.subr.bf16.mxu0 0
      %226 = vmatpush1.bf16.msra.mxu0 0
      %227 = vmatprep.subr.bf16.mxu0 0
      %228 = vmatpush1.bf16.msra.mxu0 0
      %229 = vmatprep.subr.bf16.mxu0 0
      %230 = vmatpush1.bf16.msra.mxu0 0
      %231 = vmatprep.subr.bf16.mxu0 0
      %232 = vmatpush1.bf16.msra.mxu0 0
      %233 = vmatprep.subr.bf16.mxu0 0
      %234 = vmatpush1.bf16.msra.mxu0 0
      %235 = vmatprep.subr.bf16.mxu0 0
      %236 = vmatpush1.bf16.msra.mxu0 0
      %237 = vmatprep.subr.bf16.mxu0 0
      %238 = vmatpush1.bf16.msra.mxu0 0
      %239 = vmatprep.subr.bf16.mxu0 0
      %240 = vmatpush1.bf16.msra.mxu0 0
      %241 = vmatprep.subr.bf16.mxu0 0
      %242 = vmatpush1.bf16.msra.mxu0 0
      %243 = vmatprep.subr.bf16.mxu0 0
      %244 = vmatpush1.bf16.msra.mxu0 0
      %245 = vmatprep.mubr.bf16.mxu0 0
      %246 = vmatmul.mubr.bf16.gmra.mrb[0].mxu0 %v204
      %v247 = vpop.f32.mrb[0].mxu0
      %v248 = vadd.f32 0.0, %v247
      %v249 = vpop.f32.mrb[0].mxu0
      %v250 = vadd.f32 0.0, %v249
      %v251 = vpop.f32.mrb[0].mxu0
      %v252 = vpop.f32.mrb[0].mxu0
      %253 = vdwg.mxu0
      %254 = vst [vmem:[%s181] sm:$0xff] %v248
      %255 = vst [vmem:[%s181 + $0x8] sm:$0xff] %v250
      %s256 = smul.u32 2, %s18
      %p257 = scmp.lt.s32.totalorder %s17, 1
      %s258 = scalar_select %p257, %s17, 1
      %p259 = scmp.lt.s32.totalorder %s256, 1
      %s260 = scalar_select %p259, %s256, 1
      %s261 = smul.addr %s258, 2
      %s262 = sadd.s32 %s260, %s261
      %s263 = smul.addr %s262, 8
      %s264 = scalar_lea.vmem %s2, %s263
      // Predicated region
      $region29: #{dcnv3_failed_forward.3} parent=27 // pred_check
        %p265 = pneg %p94
      $region30: #{dcnv3_failed_forward.3} parent=27 // pred_check_branch
        %267 = sbr.rel (%p265) target = $region32
      $region31: #{dcnv3_failed_forward.3} parent=27 // pred_region
        %s268 = smul.u32 2, %s18
      $region32: #{dcnv3_failed_forward.3} parent=27 // pred_fallthru
        _
    $region28: #{dcnv3_failed_forward.3} parent=5 // pred_fallthru
      _
    %p269 = scmp.le.s32.totalorder 2, %s8
    // Predicated region
    $region33: #{dcnv3_failed_forward.3} parent=5 // pred_check
      %p270 = pneg %p269
    $region34: #{dcnv3_failed_forward.3} parent=5 // pred_check_branch
      %272 = sbr.rel (%p270) target = $region36
    $region35: #{dcnv3_failed_forward.3} parent=5 // pred_region
      %s273 = ssub.s32 %s8, 2
      // Predicated region
      $region37: #{dcnv3_failed_forward.3} parent=35 // pred_check
        %p274 = pneg %p100
      $region38: #{dcnv3_failed_forward.3} parent=35 // pred_check_branch
        %276 = sbr.rel (%p274) target = $region40
      $region39: #{dcnv3_failed_forward.3} parent=35 // pred_region
        %s277 = smul.u32 2, %s20
        %p278 = scmp.lt.s32.totalorder %s19, 1
        %s279 = scalar_select %p278, %s19, 1
        %p280 = scmp.lt.s32.totalorder %s277, 1
        %s281 = scalar_select %p280, %s277, 1
        %s282 = smul.addr %s279, 2
        %s283 = sadd.s32 %s281, %s282
        %s284 = smul.addr %s283, 8
        %s285 = scalar_lea.vmem %s2, %s284
      $region40: #{dcnv3_failed_forward.3} parent=35 // pred_fallthru
        _
    $region36: #{dcnv3_failed_forward.3} parent=5 // pred_fallthru
      _
  $region6: #{dcnv3_failed_forward.3} parent=0 // loop_footer
    %s12 = sadd.s32 1, %s8
  $region7: #{dcnv3_failed_forward.3} parent=0 // loop_footer_branch
    %7 = sbr.rel target = $region3
  $region8: #{dcnv3_failed_forward.3} parent=0 // loop_exit
    _

</llo_original>
